<compile_context>
chip_gen: v6e
topology: v6e:2x2x1
jax: 0.10.0
libtpu: 0.0.40
codegen_flags: <defaults>
</compile_context>

<pallas_src>
import numpy as np
import jax
import jax.numpy as jnp
from jax import lax
from jax.experimental import pallas as pl
from jax.experimental.pallas import tpu as pltpu


def _subpixel_weight_slabs(weight_oihw, W):
    """Fold 3x3 taps x 2x2 sub-pixel positions x C_in into 3 banded slabs.

    Returns V of shape (3, W*Cin, 2*W*2*Cout) such that
      out[2y+ry, 2x+rx, co] =
        sum_a  x_rowpad[y+a, :, :].ravel() @ V[a][:, ry*2*W*Cout + (2x+rx)*Cout + co]
    with out-of-range rows handled by the zero row padding of the kernel input
    and out-of-range columns folded away (their band entries are absent).
    """
    Cout, Cin, KH, KW = weight_oihw.shape
    assert KH == 3 and KW == 3
    w_hwio = jnp.transpose(weight_oihw.astype(jnp.float32), (2, 3, 1, 0))  # (dy,dx,ci,co)

    # Row tap a in {0,1,2} (index into the row-padded window) hit by output
    # sub-row ry for kernel row dy:  a = floor((ry+dy-1)/2) + 1.
    rowsel = np.zeros((3, 2, 3), np.float32)
    for ry in range(2):
        for dy in range(3):
            rowsel[(ry + dy - 1) // 2 + 1, ry, dy] = 1.0

    # Input column p hit by output column (x, rx) for kernel col dx:
    # p = x + floor((rx+dx-1)/2); out-of-range taps land on the zero border.
    colsel = np.zeros((W, 2, 3, W), np.float32)
    for rx in range(2):
        for dx in range(3):
            off = (rx + dx - 1) // 2
            for x in range(W):
                p = x + off
                if 0 <= p < W:
                    colsel[p, rx, dx, x] = 1.0

    # V6[a, p, ci, ry, x, rx, co]
    v6 = jnp.einsum('ard,psex,deio->apirxso', rowsel, colsel, w_hwio)
    return v6.reshape(3, W * Cin, 2 * W * 2 * Cout)


def _make_kernel(bblk, H, kin, nout):
    M = bblk * H

    def kernel(x_ref, v_ref, b_ref, o_ref):
        # x_ref: (bblk, H+2, kin)  bf16; rows 0 / H+1 of every image are zero
        # v_ref: (3, kin, nout)    bf16 banded weight slabs (one per row tap)
        # b_ref: (1, nout)         f32 bias tiled over (ry, x, rx)
        # o_ref: (bblk, H, nout)   bf16; kernel row y holds output rows 2y, 2y+1
        def tap(a):
            if bblk == 1:
                return x_ref[0, a:a + H, :]
            # Fold the batch block into the MXU M dimension (M = bblk*H).
            return x_ref[:, a:a + H, :].reshape(M, kin)

        acc = jnp.dot(tap(0), v_ref[0], preferred_element_type=jnp.float32)
        acc = acc + jnp.dot(tap(1), v_ref[1], preferred_element_type=jnp.float32)
        acc = acc + jnp.dot(tap(2), v_ref[2], preferred_element_type=jnp.float32)
        acc = acc + b_ref[...]
        o_ref[...] = acc.astype(o_ref.dtype).reshape(bblk, H, nout)

    return kernel


def upsample_module(x_nchw, weight_oihw, bias, out_dtype=jnp.float32):
    """Equivalent of Upsample(dim).forward(x) for NCHW input."""
    B, C, H, W = x_nchw.shape
    Cout, Cin, KH, KW = weight_oihw.shape
    assert (Cout, Cin, KH, KW) == (C, C, 3, 3)

    kin, nout = W * C, 4 * W * C

    # Batch blocking: <= 2 parallel grid steps (keeps both v7x TensorCores
    # busy) with the batch folded into M inside each step.
    if B > 1 and B % 2 == 0:
        grid_b, bblk = 2, B // 2
    else:
        grid_b, bblk = 1, B

    # Small-input prep (tiny vs. the 4x output): NCHW->NHWC on the small
    # tensor, bf16, zero-pad ROWS only (column padding is folded into the
    # banded weights), flatten (W, C) onto the lane axis.
    x_nhwc = jnp.transpose(x_nchw, (0, 2, 3, 1)).astype(jnp.bfloat16)
    x_rows = jnp.pad(x_nhwc, ((0, 0), (1, 1), (0, 0), (0, 0)))
    x_flat = x_rows.reshape(B, H + 2, kin)

    v_slab = _subpixel_weight_slabs(weight_oihw, W).astype(jnp.bfloat16)
    bias_row = jnp.tile(bias.astype(jnp.float32), 4 * W).reshape(1, nout)

    # VMEM budget (double-buffered blocks + f32 accumulator + headroom).
    x_blk_b = bblk * (H + 2) * kin * 2
    v_b = 3 * kin * nout * 2
    o_blk_b = bblk * H * nout * 2
    acc_b = bblk * H * nout * 4
    vmem_need = 2 * (x_blk_b + v_b + o_blk_b + nout * 4) + acc_b + (4 << 20)
    vmem_limit = int(min(max(32 << 20, vmem_need), 64 << 20))

    flops = 2 * B * H * (3 * kin) * nout
    bytes_accessed = (B * (H + 2) * kin * 2 + 3 * kin * nout * 2
                      + nout * 4 + B * H * nout * 2)

    out_flat = pl.pallas_call(
        _make_kernel(bblk, H, kin, nout),
        out_shape=jax.ShapeDtypeStruct((B, H, nout), jnp.bfloat16),
        grid_spec=pltpu.PrefetchScalarGridSpec(
            num_scalar_prefetch=0,
            grid=(grid_b,),
            in_specs=[
                pl.BlockSpec((bblk, H + 2, kin), lambda b: (b, 0, 0)),
                pl.BlockSpec((3, kin, nout), lambda b: (0, 0, 0)),
                pl.BlockSpec((1, nout), lambda b: (0, 0)),
            ],
            out_specs=pl.BlockSpec((bblk, H, nout), lambda b: (b, 0, 0)),
        ),
        compiler_params=pltpu.CompilerParams(
            dimension_semantics=("parallel",),
            vmem_limit_bytes=vmem_limit),
        cost_estimate=pl.CostEstimate(
            flops=flops, transcendentals=0, bytes_accessed=bytes_accessed),
    )(x_flat, v_slab, bias_row)

    # (B, H, [ry, x, rx, c]) has the same row-major layout as NHWC (B,2H,2W,C),
    # so this reshape is a view.  The NCHW transpose runs on bf16 (half the
    # HBM traffic of an f32 transpose) fused with the cast to the output dtype.
    out_nhwc = out_flat.reshape(B, 2 * H, 2 * W, C)
    return jnp.transpose(out_nhwc, (0, 3, 1, 2)).astype(out_dtype)


if __name__ == "__main__":
    key = jax.random.PRNGKey(0)
    k_x, k_w, k_b = jax.random.split(key, 3)

    B, C, H, W = 2, 4, 16, 16
    x = jax.random.normal(k_x, (B, C, H, W), dtype=jnp.float32)

    # Deterministic synthetic parameters (Conv2d(dim, dim, 3) shapes).
    fan_in = C * 3 * 3
    bound = 1.0 / (fan_in ** 0.5)
    weight = jax.random.uniform(k_w, (C, C, 3, 3), jnp.float32, -bound, bound)
    bias = jax.random.uniform(k_b, (C,), jnp.float32, -bound, bound)

    out = upsample_module(x, weight, bias)
    out = jax.block_until_ready(out)
    assert out.shape == (B, C, 2 * H, 2 * W)

    # Reference: nearest x2 upsample + 'same' 3x3 conv in f32 XLA.
    x_up = jnp.repeat(jnp.repeat(x, 2, axis=2), 2, axis=3)
    ref = lax.conv_general_dilated(
        x_up, weight, window_strides=(1, 1), padding=((1, 1), (1, 1)),
        dimension_numbers=("NCHW", "OIHW", "NCHW")) + bias.reshape(1, C, 1, 1)
    # bf16 matmul operands / bf16 kernel output (f32 accumulation) -> loosened
    # tolerance vs the f32 reference, as documented in the perf review.
    assert jnp.allclose(out, ref, atol=5e-2, rtol=5e-2), (
        float(jnp.max(jnp.abs(out - ref))))
    print("KERNEL_OK")
</pallas_src>

<mosaic_0001>
module attributes {stable_mosaic.version = 11 : i64} {
  func.func @kernel(%arg0: i32, %arg1: memref<1x18x64xbf16, #tpu.memory_space<vmem>>, %arg2: memref<3x64x256xbf16, #tpu.memory_space<vmem>>, %arg3: memref<1x256xf32, #tpu.memory_space<vmem>>, %arg4: memref<1x16x256xbf16, #tpu.memory_space<vmem>>) attributes {dimension_semantics = [#tpu.dimension_semantics<parallel>], iteration_bounds = array<i64: 2>, scalar_prefetch = 0 : i64, scratch_operands = 0 : i64, tpu.core_type = #tpu.core_type<tc>, window_params = [{transform_indices = @transform_0, window_bounds = array<i64: 1, 18, 64>}, {pipeline_mode = #tpu.pipeline_mode<synchronous>, transform_indices = @transform_1, window_bounds = array<i64: 3, 64, 256>}, {pipeline_mode = #tpu.pipeline_mode<synchronous>, transform_indices = @transform_2, window_bounds = array<i64: 1, 256>}, {transform_indices = @transform_3, window_bounds = array<i64: 1, 16, 256>}]} {
    %c0 = arith.constant 0 : index
    %c0_0 = arith.constant 0 : index
    %c0_1 = arith.constant 0 : index
    %0 = vector.load %arg1[%c0, %c0_0, %c0_1] : memref<1x18x64xbf16, #tpu.memory_space<vmem>>, vector<1x16x64xbf16>
    %1 = vector.shape_cast %0 : vector<1x16x64xbf16> to vector<16x64xbf16>
    %c0_2 = arith.constant 0 : index
    %c0_3 = arith.constant 0 : index
    %c0_4 = arith.constant 0 : index
    %2 = vector.load %arg2[%c0_2, %c0_3, %c0_4] : memref<3x64x256xbf16, #tpu.memory_space<vmem>>, vector<1x64x256xbf16>
    %3 = vector.shape_cast %2 : vector<1x64x256xbf16> to vector<64x256xbf16>
    %cst = arith.constant dense<0.000000e+00> : vector<16x256xf32>
    %4 = tpu.matmul %1, %3, %cst {dimension_numbers = #tpu.dot_dimension_numbers<[1], [0], [0], [1], [0, 0, 1, 1], [], []>} : vector<16x64xbf16>, vector<64x256xbf16>, vector<16x256xf32> -> vector<16x256xf32>
    %c0_5 = arith.constant 0 : index
    %c1 = arith.constant 1 : index
    %c0_6 = arith.constant 0 : index
    %5 = vector.load %arg1[%c0_5, %c1, %c0_6] : memref<1x18x64xbf16, #tpu.memory_space<vmem>>, vector<1x16x64xbf16>
    %6 = vector.shape_cast %5 : vector<1x16x64xbf16> to vector<16x64xbf16>
    %c1_7 = arith.constant 1 : index
    %c0_8 = arith.constant 0 : index
    %c0_9 = arith.constant 0 : index
    %7 = vector.load %arg2[%c1_7, %c0_8, %c0_9] : memref<3x64x256xbf16, #tpu.memory_space<vmem>>, vector<1x64x256xbf16>
    %8 = vector.shape_cast %7 : vector<1x64x256xbf16> to vector<64x256xbf16>
    %cst_10 = arith.constant dense<0.000000e+00> : vector<16x256xf32>
    %9 = tpu.matmul %6, %8, %cst_10 {dimension_numbers = #tpu.dot_dimension_numbers<[1], [0], [0], [1], [0, 0, 1, 1], [], []>} : vector<16x64xbf16>, vector<64x256xbf16>, vector<16x256xf32> -> vector<16x256xf32>
    %10 = arith.addf %4, %9 : vector<16x256xf32>
    %c0_11 = arith.constant 0 : index
    %c2 = arith.constant 2 : index
    %c0_12 = arith.constant 0 : index
    %11 = vector.load %arg1[%c0_11, %c2, %c0_12] : memref<1x18x64xbf16, #tpu.memory_space<vmem>>, vector<1x16x64xbf16>
    %12 = vector.shape_cast %11 : vector<1x16x64xbf16> to vector<16x64xbf16>
    %c2_13 = arith.constant 2 : index
    %c0_14 = arith.constant 0 : index
    %c0_15 = arith.constant 0 : index
    %13 = vector.load %arg2[%c2_13, %c0_14, %c0_15] : memref<3x64x256xbf16, #tpu.memory_space<vmem>>, vector<1x64x256xbf16>
    %14 = vector.shape_cast %13 : vector<1x64x256xbf16> to vector<64x256xbf16>
    %cst_16 = arith.constant dense<0.000000e+00> : vector<16x256xf32>
    %15 = tpu.matmul %12, %14, %cst_16 {dimension_numbers = #tpu.dot_dimension_numbers<[1], [0], [0], [1], [0, 0, 1, 1], [], []>} : vector<16x64xbf16>, vector<64x256xbf16>, vector<16x256xf32> -> vector<16x256xf32>
    %16 = arith.addf %10, %15 : vector<16x256xf32>
    %c0_17 = arith.constant 0 : index
    %c0_18 = arith.constant 0 : index
    %17 = vector.load %arg3[%c0_17, %c0_18] : memref<1x256xf32, #tpu.memory_space<vmem>>, vector<1x256xf32>
    %18 = vector.broadcast %17 : vector<1x256xf32> to vector<16x256xf32>
    %19 = arith.addf %16, %18 : vector<16x256xf32>
    %20 = arith.truncf %19 : vector<16x256xf32> to vector<16x256xbf16>
    %21 = vector.shape_cast %20 : vector<16x256xbf16> to vector<1x16x256xbf16>
    %c0_19 = arith.constant 0 : index
    %c0_20 = arith.constant 0 : index
    %c0_21 = arith.constant 0 : index
    %22 = vector.load %arg4[%c0_19, %c0_20, %c0_21] : memref<1x16x256xbf16, #tpu.memory_space<vmem>>, vector<1x16x256xbf16>
    tpu.vector_store %arg4[%c0_19, %c0_20, %c0_21], %21 {strides = array<i32>} : memref<1x16x256xbf16, #tpu.memory_space<vmem>>, vector<1x16x256xbf16>,
    return
  }
  func.func @transform_0(%arg0: i32) -> (i32, i32, i32) {
    %c0_i32 = arith.constant 0 : i32
    %c0_i32_0 = arith.constant 0 : i32
    %c0_i32_1 = arith.constant 0 : i32
    return %arg0, %c0_i32, %c0_i32_0 : i32, i32, i32
  }
  func.func @transform_1(%arg0: i32) -> (i32, i32, i32) {
    %c0_i32 = arith.constant 0 : i32
    %c0_i32_0 = arith.constant 0 : i32
    %c0_i32_1 = arith.constant 0 : i32
    %c0_i32_2 = arith.constant 0 : i32
    return %c0_i32, %c0_i32_0, %c0_i32_1 : i32, i32, i32
  }
  func.func @transform_2(%arg0: i32) -> (i32, i32) {
    %c0_i32 = arith.constant 0 : i32
    %c0_i32_0 = arith.constant 0 : i32
    %c0_i32_1 = arith.constant 0 : i32
    return %c0_i32, %c0_i32_0 : i32, i32
  }
  func.func @transform_3(%arg0: i32) -> (i32, i32, i32) {
    %c0_i32 = arith.constant 0 : i32
    %c0_i32_0 = arith.constant 0 : i32
    %c0_i32_1 = arith.constant 0 : i32
    return %arg0, %c0_i32, %c0_i32_0 : i32, i32, i32
  }
}

</mosaic_0001>

<llo_original>
// kernel: tpu_custom_call.1
$region0: #{tpu_custom_call.1}
  #allocation0 [shape = 'u32[]', space=smem, size = 0x4, offset = 0x4, fixed_abs, tag = 'smem constant byte address 0x4 - core index']
  #allocation1 [shape = 'u32[144,128]{1,0:T(1,128)}', space=vmem, size = 0x12000, scoped, tag = 'internal scratch']
  %s0 = inlined_call_operand.vmem [shape: bf16[2,18,64], index: 0, kind: input, shape index: {}]
  %s1 = inlined_call_operand.hbm [shape: bf16[3,64,256], index: 1, kind: input, shape index: {}]
  %s2 = inlined_call_operand.vmem [shape: f32[1,256], index: 2, kind: input, shape index: {}]
  %s3 = inlined_call_operand.hbm [shape: bf16[2,16,256], index: 3, kind: output, shape index: {}]
  %s4 = sld [smem:[#allocation0]]
  $region49: #{tpu_custom_call.1} parent=0
    _
  %s6 = ssub.s32 1, %s4
  %s7 = scalar_select 0, %s6, %s4
  $region1: #{tpu_custom_call.1} parent=0
    #allocation2 [shape = 'u8[98304]{0}', space=vmem, size = 0x18000, scoped, tag = 'input window, operand 1, single buffered']
    #allocation3 [shape = 's32[2]{0}', space=sflag, size = 0x8, scoped, tag = 'scoped memory for tpu_custom_call.1']
    #allocation4 [shape = 's32[2]{0}', space=sflag, size = 0x8, scoped, tag = 'scoped memory for tpu_custom_call.1']
    #allocation5 [shape = 'u8[16384]{0}', space=vmem, size = 0x4000, scoped, tag = 'output window, operand 0']
    %8 = vsyncpa [#allocation3], 0
    %9 = vsyncpa [#allocation4], 0
    %s10 = scalar_lea.sflag [#allocation4], 1
    %11 = vsyncpa %s10, 0
    loop: start=0, step=1, limit=4
    $region2: #{tpu_custom_call.1} parent=1 // loop_pre_header
      _
    $region3: #{tpu_custom_call.1} parent=1 // loop_header
      %s13 = sphi 0, %s17
      %p14 = scmp.ge.s32.totalorder %s13, 4
      %s23 = sphi 0, %s25
      %s26 = sphi 0, %s23
      %s27 = sphi 0, %s26
      %s43 = sphi 0, %s27
      %s47 = sphi 0, %s47
      %s49 = sphi 0, %s47
      %s50 = sphi 0, %s49
      %s64 = sphi 0, %s50
      %s68 = sphi 0, %s68
      %s70 = sphi 0, %s68
      %s71 = sphi 0, %s70
      %s85 = sphi 0, %s71
      %s91 = sphi 0, %s93
      %s94 = sphi 0, %s91
      %s95 = sphi 0, %s94
      %s111 = sphi 0, %s95
    $region4: #{tpu_custom_call.1} parent=1 // loop_header_branch
      %16 = sbr.rel (%p14) target = $region8
    $region5: #{tpu_custom_call.1} parent=1 // loop_body
      %s18 = ssub.s32 %s13, 1
      %s19 = ssub.s32 %s13, 2
      %s20 = sadd.s32 %s13, 1
      %s21 = ssub.s32 %s13, %s20
      %p22 = scmp.eq.s32.totalorder %s21, 0
      %s24 = sadd.s32 %s23, 1
      %s25 = scalar_select %p22, %s23, %s24
      %p28 = pneg %p22
      %p29 = scmp.eq.s32.totalorder %s13, 1
      %p30 = por %p28, %p29
      %p31 = scmp.ne.s32.totalorder %s23, %s26
      %p32 = scmp.eq.s32.totalorder %s13, 0
      %p33 = por %p31, %p32
      %p34 = scmp.ne.s32.totalorder %s23, %s26
      %p35 = scmp.eq.s32.totalorder %s18, 1
      %p36 = por %p34, %p35
      %p37 = scmp.ne.s32.totalorder %s26, %s27
      %p38 = scmp.eq.s32.totalorder %s18, 0
      %p39 = por %p37, %p38
      %p40 = scmp.ne.s32.totalorder %s26, %s27
      %p41 = scmp.eq.s32.totalorder %s19, 1
      %p42 = por %p40, %p41
      %p44 = scmp.ne.s32.totalorder %s27, %s43
      %p45 = scmp.eq.s32.totalorder %s19, 0
      %p46 = por %p44, %p45
      %s48 = sadd.s32 %s47, 1
      %p51 = scmp.eq.s32.totalorder %s13, 1
      %p52 = scmp.ne.s32.totalorder %s47, %s49
      %p53 = scmp.eq.s32.totalorder %s13, 0
      %p54 = por %p52, %p53
      %p55 = scmp.ne.s32.totalorder %s47, %s49
      %p56 = scmp.eq.s32.totalorder %s18, 1
      %p57 = por %p55, %p56
      %p58 = scmp.ne.s32.totalorder %s49, %s50
      %p59 = scmp.eq.s32.totalorder %s18, 0
      %p60 = por %p58, %p59
      %p61 = scmp.ne.s32.totalorder %s49, %s50
      %p62 = scmp.eq.s32.totalorder %s19, 1
      %p63 = por %p61, %p62
      %p65 = scmp.ne.s32.totalorder %s50, %s64
      %p66 = scmp.eq.s32.totalorder %s19, 0
      %p67 = por %p65, %p66
      %s69 = sadd.s32 %s68, 1
      %p72 = scmp.eq.s32.totalorder %s13, 1
      %p73 = scmp.ne.s32.totalorder %s68, %s70
      %p74 = scmp.eq.s32.totalorder %s13, 0
      %p75 = por %p73, %p74
      %p76 = scmp.ne.s32.totalorder %s68, %s70
      %p77 = scmp.eq.s32.totalorder %s18, 1
      %p78 = por %p76, %p77
      %p79 = scmp.ne.s32.totalorder %s70, %s71
      %p80 = scmp.eq.s32.totalorder %s18, 0
      %p81 = por %p79, %p80
      %p82 = scmp.ne.s32.totalorder %s70, %s71
      %p83 = scmp.eq.s32.totalorder %s19, 1
      %p84 = por %p82, %p83
      %p86 = scmp.ne.s32.totalorder %s71, %s85
      %p87 = scmp.eq.s32.totalorder %s19, 0
      %p88 = por %p86, %p87
      %s89 = ssub.s32 %s13, %s20
      %p90 = scmp.eq.s32.totalorder %s89, 0
      %s92 = sadd.s32 %s91, 1
      %s93 = scalar_select %p90, %s91, %s92
      %p96 = pneg %p90
      %p97 = scmp.eq.s32.totalorder %s13, 1
      %p98 = por %p96, %p97
      %p99 = scmp.ne.s32.totalorder %s91, %s94
      %p100 = scmp.eq.s32.totalorder %s13, 0
      %p101 = por %p99, %p100
      %p102 = scmp.ne.s32.totalorder %s91, %s94
      %p103 = scmp.eq.s32.totalorder %s18, 1
      %p104 = por %p102, %p103
      %p105 = scmp.ne.s32.totalorder %s94, %s95
      %p106 = scmp.eq.s32.totalorder %s18, 0
      %p107 = por %p105, %p106
      %p108 = scmp.ne.s32.totalorder %s94, %s95
      %p109 = scmp.eq.s32.totalorder %s19, 1
      %p110 = por %p108, %p109
      %p112 = scmp.ne.s32.totalorder %s95, %s111
      %p113 = scmp.eq.s32.totalorder %s19, 0
      %p114 = por %p112, %p113
      %p115 = scmp.le.s32.totalorder 1, %s13
      %p116 = scmp.lt.s32.totalorder %s13, 3
      %p117 = pnand %p115, %p116
      %p118 = pneg %p117
      // Predicated region
      $region9: #{tpu_custom_call.1} parent=5 // pred_check
        _
      $region10: #{tpu_custom_call.1} parent=5 // pred_check_branch
        %120 = sbr.rel (%p117) target = $region12
      $region11: #{tpu_custom_call.1} parent=5 // pred_region
        %s121 = ssub.s32 %s13, 1
        // Predicated region
        $region13: #{tpu_custom_call.1} parent=11 // pred_check
          %p122 = pneg %p60
        $region14: #{tpu_custom_call.1} parent=11 // pred_check_branch
          %124 = sbr.rel (%p122) target = $region16
        $region15: #{tpu_custom_call.1} parent=11 // pred_region
          %s126 = ssub.s32 3072, 3072
          %127 = vsyncadd [#allocation3], %s126
          %s128 = sshll.u32 [#allocation2], 4
          %s129 = int_to_ptr.vmem [resolvable:$true] %s128
          %134 = dma.hbm_to_vmem [thread:$0]  %s1, 3072, %s129, [#allocation3], 128, 128, 8
        $region16: #{tpu_custom_call.1} parent=11 // pred_fallthru
          _
        // Predicated region
        $region17: #{tpu_custom_call.1} parent=11 // pred_check
          %p135 = pneg %p81
        $region18: #{tpu_custom_call.1} parent=11 // pred_check_branch
          %137 = sbr.rel (%p135) target = $region20
        $region19: #{tpu_custom_call.1} parent=11 // pred_region
          _
        $region20: #{tpu_custom_call.1} parent=11 // pred_fallthru
          _
      $region12: #{tpu_custom_call.1} parent=5 // pred_fallthru
        _
      %p138 = scmp.lt.s32.totalorder %s13, 2
      // Predicated region
      $region21: #{tpu_custom_call.1} parent=5 // pred_check
        %p139 = pneg %p138
      $region22: #{tpu_custom_call.1} parent=5 // pred_check_branch
        %141 = sbr.rel (%p139) target = $region24
      $region23: #{tpu_custom_call.1} parent=5 // pred_region
        // Predicated region
        $region25: #{tpu_custom_call.1} parent=23 // pred_check
          %p142 = pneg %p33
        $region26: #{tpu_custom_call.1} parent=23 // pred_check_branch
          %144 = sbr.rel (%p142) target = $region28
        $region27: #{tpu_custom_call.1} parent=23 // pred_region
          %p145 = scmp.lt.s32.totalorder %s13, 1
          %s146 = scalar_select %p145, %s13, 1
          %s147 = smul.addr %s146, 3
          %s148 = smul.addr %s147, 4
          %s149 = scalar_lea.vmem %s0, %s148
        $region28: #{tpu_custom_call.1} parent=23 // pred_fallthru
          _
      $region24: #{tpu_custom_call.1} parent=5 // pred_fallthru
        _
      %p150 = scmp.le.s32.totalorder 1, %s13
      %p151 = scmp.lt.s32.totalorder %s13, 3
      %p152 = pnand %p150, %p151
      %p153 = pneg %p152
      // Predicated region
      $region29: #{tpu_custom_call.1} parent=5 // pred_check
        _
      $region30: #{tpu_custom_call.1} parent=5 // pred_check_branch
        %155 = sbr.rel (%p152) target = $region32
      $region31: #{tpu_custom_call.1} parent=5 // pred_region
        %s156 = ssub.s32 %s13, 1
        // Predicated region
        $region33: #{tpu_custom_call.1} parent=31 // pred_check
          %p157 = pneg %p60
        $region34: #{tpu_custom_call.1} parent=31 // pred_check_branch
          %159 = sbr.rel (%p157) target = $region36
        $region35: #{tpu_custom_call.1} parent=31 // pred_region
          %160 = dma.done [#allocation3], 3072
        $region36: #{tpu_custom_call.1} parent=31 // pred_fallthru
          _
        %p161 = scmp.lt.s32.totalorder %s18, 1
        %s162 = scalar_select %p161, %s18, 1
        %s163 = smul.addr %s162, 3
        %s164 = smul.addr %s163, 4
        %s165 = scalar_lea.vmem %s0, %s164
        %p166 = pneg %p39
        %p167 = pneg %p36
        %p168 = pneg %p60
        %p169 = pneg %p57
        %p170 = pneg %p81
        %p171 = pneg %p78
        %p172 = pneg %p107
        %p173 = pneg %p104
        %s174 = sand.u32 %s94, 1
        %s175 = scalar_lea.sflag [#allocation4], %s174
        %s176 = sand.u32 %s94, 1
        %s177 = smul.addr %s176, 16
        %s178 = scalar_lea.vmem [#allocation5], %s177
        %p179 = scmp.lt.s32.totalorder %s18, 1
        %s180 = scalar_select %p179, %s18, 1
        %s181 = smul.addr %s180, 3
        %s182 = smul.addr %s181, 4
        %s183 = scalar_lea.vmem %s0, %s182
        %v185 = vld [vmem:[%s183] sm:$0xf]
        %v186 = vld [vmem:[%s183 + $0x4] sm:$0xf]
        %v187 = vld [vmem:[#allocation2] sm:$0xff]
        %v188 = vld [vmem:[#allocation2 + $0x8] sm:$0xff]
        %v189 = vld [vmem:[#allocation2 + $0x10] sm:$0xff]
        %v190 = vld [vmem:[#allocation2 + $0x18] sm:$0xff]
        %v191 = vld [vmem:[#allocation2 + $0x20] sm:$0xff]
        %v192 = vld [vmem:[#allocation2 + $0x28] sm:$0xff]
        %v193 = vld [vmem:[#allocation2 + $0x30] sm:$0xff]
        %v194 = vld [vmem:[#allocation2 + $0x38] sm:$0xff]
        %v195 = vld [vmem:[%s183 + $0x8] sm:$0x1]
        %s196 = scalar_lea.vmem [#allocation2], 64
        %v197 = vld [vmem:[%s196] sm:$0xff]
        %v198 = vld [vmem:[%s196 + $0x8] sm:$0xff]
        %v199 = vld [vmem:[%s196 + $0x10] sm:$0xff]
        %v200 = vld [vmem:[%s196 + $0x18] sm:$0xff]
        %v201 = vld [vmem:[%s196 + $0x20] sm:$0xff]
        %v202 = vld [vmem:[%s196 + $0x28] sm:$0xff]
        %v203 = vld [vmem:[%s196 + $0x30] sm:$0xff]
        %v204 = vld [vmem:[%s196 + $0x38] sm:$0xff]
        %v208 = vunpack.c.l.b16 %v185
        %v209 = vunpack.c.l.b16 %v186
        %v210 = vunpack.c.l.b16 %v195
        %v211 = vpack.c.b16 %v209, %v208
        %v212 = vpack.c.b16 %v210, %v210
        %vm213 = vsmask.f32 7424
        %v215 = vshrl.u32 %v211, 16
        %v217 = vshll.u32 %v211, 16
        %v219 = vrot.slane %v217, 1
        %v220 = vor.u32 %v215, %v219
        %v222 = vshll.u32 %v212, 16
        %v224 = vrot.slane %v222, 1
        %v225 = vsel %vm213, %v220, %v224
        %v234 = vunpack.c.l.b16 %v197
        %v235 = vunpack.c.h.b16 %v197
        %v236 = vunpack.c.l.b16 %v198
        %v237 = vunpack.c.h.b16 %v198
        %v238 = vunpack.c.l.b16 %v199
        %v239 = vunpack.c.h.b16 %v199
        %v240 = vunpack.c.l.b16 %v200
        %v241 = vunpack.c.h.b16 %v200
        %v242 = vunpack.c.l.b16 %v201
        %v243 = vunpack.c.h.b16 %v201
        %v244 = vunpack.c.l.b16 %v202
        %v245 = vunpack.c.h.b16 %v202
        %v246 = vunpack.c.l.b16 %v203
        %v247 = vunpack.c.h.b16 %v203
        %v248 = vunpack.c.l.b16 %v204
        %v249 = vunpack.c.h.b16 %v204
        %v250 = vpack.c.b16 %v236, %v234
        %v251 = vpack.c.b16 %v237, %v235
        %v252 = vpack.c.b16 %v240, %v238
        %v253 = vpack.c.b16 %v241, %v239
        %v254 = vpack.c.b16 %v244, %v242
        %v255 = vpack.c.b16 %v245, %v243
        %v256 = vpack.c.b16 %v248, %v246
        %v257 = vpack.c.b16 %v249, %v247
        %vm266 = vcmask 523264
        %v268 = vsel %vm266, %v225, 0
        %270 = vmatprep.subr.bf16.mxu0 0
        %271 = vmatpush1.bf16.msra.mxu0 0
        %272 = vmatprep.subr.bf16.mxu0 0
        %273 = vmatpush1.bf16.msra.mxu0 0
        %274 = vmatprep.subr.bf16.mxu0 0
        %275 = vmatpush1.bf16.msra.mxu0 0
        %276 = vmatprep.subr.bf16.mxu0 0
        %277 = vmatpush1.bf16.msra.mxu0 0
        %278 = vmatprep.subr.bf16.mxu0 %v257
        %279 = vmatpush1.bf16.msra.mxu0 %v256
        %280 = vmatprep.subr.bf16.mxu0 %v255
        %281 = vmatpush1.bf16.msra.mxu0 %v254
        %282 = vmatprep.subr.bf16.mxu0 %v253
        %283 = vmatpush1.bf16.msra.mxu0 %v252
        %284 = vmatprep.subr.bf16.mxu0 %v251
        %285 = vmatpush1.bf16.msra.mxu0 %v250
        %286 = vmatprep.subr.bf16.mxu0 0
        %287 = vmatpush2.bf16.msra.mxu0 0
        %288 = vmatprep.subr.bf16.mxu0 0
        %289 = vmatpush2.bf16.msra.mxu0 0
        %290 = vmatprep.subr.bf16.mxu0 0
        %291 = vmatpush2.bf16.msra.mxu0 0
        %292 = vmatprep.subr.bf16.mxu0 0
        %293 = vmatpush2.bf16.msra.mxu0 0
        %294 = vmatprep.subr.bf16.mxu0 0
        %295 = vmatpush2.bf16.msra.mxu0 0
        %296 = vmatprep.subr.bf16.mxu0 0
        %297 = vmatpush2.bf16.msra.mxu0 0
        %298 = vmatprep.subr.bf16.mxu0 0
        %299 = vmatpush2.bf16.msra.mxu0 0
        %300 = vmatprep.subr.bf16.mxu0 0
        %301 = vmatpush2.bf16.msra.mxu0 0
        %302 = vmatprep.mubr.bf16.mxu0 0
        %303 = vmatmul.mubr.bf16.gmra.mxu0 %v268
        %v304 = vpop.f32.mrf.mxu0
        %v305 = vadd.f32 0.0, %v304
        %v306 = vpop.f32.mrf.mxu0
        %v307 = vadd.f32 0.0, %v306
        %v308 = vpop.f32.mrf.mxu0
        %v309 = vadd.f32 0.0, %v308
        %v310 = vpop.f32.mrf.mxu0
        %v311 = vadd.f32 0.0, %v310
        %312 = vdwg.mxu0
        %v321 = vunpack.c.l.b16 %v187
        %v322 = vunpack.c.h.b16 %v187
        %v323 = vunpack.c.l.b16 %v188
        %v324 = vunpack.c.h.b16 %v188
        %v325 = vunpack.c.l.b16 %v189
        %v326 = vunpack.c.h.b16 %v189
        %v327 = vunpack.c.l.b16 %v190
        %v328 = vunpack.c.h.b16 %v190
        %v329 = vunpack.c.l.b16 %v191
        %v330 = vunpack.c.h.b16 %v191
        %v331 = vunpack.c.l.b16 %v192
        %v332 = vunpack.c.h.b16 %v192
        %v333 = vunpack.c.l.b16 %v193
        %v334 = vunpack.c.h.b16 %v193
        %v335 = vunpack.c.l.b16 %v194
        %v336 = vunpack.c.h.b16 %v194
        %v337 = vpack.c.b16 %v323, %v321
        %v338 = vpack.c.b16 %v324, %v322
        %v339 = vpack.c.b16 %v327, %v325
        %v340 = vpack.c.b16 %v328, %v326
        %v341 = vpack.c.b16 %v331, %v329
        %v342 = vpack.c.b16 %v332, %v330
        %v343 = vpack.c.b16 %v335, %v333
        %v344 = vpack.c.b16 %v336, %v334
        %v353 = vsel %vm266, %v211, 0
        %355 = vmatprep.subr.bf16.mxu0 0
        %356 = vmatpush1.bf16.msra.mxu0 0
        %357 = vmatprep.subr.bf16.mxu0 0
        %358 = vmatpush1.bf16.msra.mxu0 0
        %359 = vmatprep.subr.bf16.mxu0 0
        %360 = vmatpush1.bf16.msra.mxu0 0
        %361 = vmatprep.subr.bf16.mxu0 0
        %362 = vmatpush1.bf16.msra.mxu0 0
        %363 = vmatprep.subr.bf16.mxu0 %v344
        %364 = vmatpush1.bf16.msra.mxu0 %v343
        %365 = vmatprep.subr.bf16.mxu0 %v342
        %366 = vmatpush1.bf16.msra.mxu0 %v341
        %367 = vmatprep.subr.bf16.mxu0 %v340
        %368 = vmatpush1.bf16.msra.mxu0 %v339
        %369 = vmatprep.subr.bf16.mxu0 %v338
        %370 = vmatpush1.bf16.msra.mxu0 %v337
        %371 = vmatprep.subr.bf16.mxu0 0
        %372 = vmatpush2.bf16.msra.mxu0 0
        %373 = vmatprep.subr.bf16.mxu0 0
        %374 = vmatpush2.bf16.msra.mxu0 0
        %375 = vmatprep.subr.bf16.mxu0 0
        %376 = vmatpush2.bf16.msra.mxu0 0
        %377 = vmatprep.subr.bf16.mxu0 0
        %378 = vmatpush2.bf16.msra.mxu0 0
        %379 = vmatprep.subr.bf16.mxu0 0
        %380 = vmatpush2.bf16.msra.mxu0 0
        %381 = vmatprep.subr.bf16.mxu0 0
        %382 = vmatpush2.bf16.msra.mxu0 0
        %383 = vmatprep.subr.bf16.mxu0 0
        %384 = vmatpush2.bf16.msra.mxu0 0
        %385 = vmatprep.subr.bf16.mxu0 0
        %386 = vmatpush2.bf16.msra.mxu0 0
        %387 = vmatprep.mubr.bf16.mxu0 0
        %388 = vmatmul.mubr.bf16.gmra.mxu0 %v353
        %v389 = vpop.f32.mrf.mxu0
        %v390 = vadd.f32 %v305, %v389
        %v391 = vpop.f32.mrf.mxu0
        %v392 = vadd.f32 %v307, %v391
        %v393 = vpop.f32.mrf.mxu0
        %v394 = vadd.f32 %v309, %v393
        %v395 = vpop.f32.mrf.mxu0
        %v396 = vadd.f32 %v311, %v395
        %397 = vdwg.mxu0
        %v398 = vld [vmem:[%s183] sm:$0xe]
        %s399 = scalar_lea.vmem [#allocation2], 128
        %v400 = vld [vmem:[%s399] sm:$0xff]
        %v401 = vld [vmem:[%s399 + $0x8] sm:$0xff]
        %v402 = vld [vmem:[%s399 + $0x10] sm:$0xff]
        %v403 = vld [vmem:[%s399 + $0x18] sm:$0xff]
        %v404 = vld [vmem:[%s399 + $0x20] sm:$0xff]
        %v405 = vld [vmem:[%s399 + $0x28] sm:$0xff]
        %v406 = vld [vmem:[%s399 + $0x30] sm:$0xff]
        %v407 = vld [vmem:[%s399 + $0x38] sm:$0xff]
        %v409 = vunpack.c.l.b16 %v398
        %v410 = vpack.c.b16 %v209, %v409
        %vm411 = vcmask 1046528
        %v412 = vrot.slane %v410, 1
        %v413 = vrot.slane %v212, 1
        %v414 = vsel %vm411, %v412, %v413
        %v423 = vunpack.c.l.b16 %v400
        %v424 = vunpack.c.h.b16 %v400
        %v425 = vunpack.c.l.b16 %v401
        %v426 = vunpack.c.h.b16 %v401
        %v427 = vunpack.c.l.b16 %v402
        %v428 = vunpack.c.h.b16 %v402
        %v429 = vunpack.c.l.b16 %v403
        %v430 = vunpack.c.h.b16 %v403
        %v431 = vunpack.c.l.b16 %v404
        %v432 = vunpack.c.h.b16 %v404
        %v433 = vunpack.c.l.b16 %v405
        %v434 = vunpack.c.h.b16 %v405
        %v435 = vunpack.c.l.b16 %v406
        %v436 = vunpack.c.h.b16 %v406
        %v437 = vunpack.c.l.b16 %v407
        %v438 = vunpack.c.h.b16 %v407
        %v439 = vpack.c.b16 %v425, %v423
        %v440 = vpack.c.b16 %v426, %v424
        %v441 = vpack.c.b16 %v429, %v427
        %v442 = vpack.c.b16 %v430, %v428
        %v443 = vpack.c.b16 %v433, %v431
        %v444 = vpack.c.b16 %v434, %v432
        %v445 = vpack.c.b16 %v437, %v435
        %v446 = vpack.c.b16 %v438, %v436
        %v456 = vsel %vm266, %v414, 0
        %458 = vmatprep.subr.bf16.mxu0 0
        %459 = vmatpush1.bf16.msra.mxu0 0
        %460 = vmatprep.subr.bf16.mxu0 0
        %461 = vmatpush1.bf16.msra.mxu0 0
        %462 = vmatprep.subr.bf16.mxu0 0
        %463 = vmatpush1.bf16.msra.mxu0 0
        %464 = vmatprep.subr.bf16.mxu0 0
        %465 = vmatpush1.bf16.msra.mxu0 0
        %466 = vmatprep.subr.bf16.mxu0 %v446
        %467 = vmatpush1.bf16.msra.mxu0 %v445
        %468 = vmatprep.subr.bf16.mxu0 %v444
        %469 = vmatpush1.bf16.msra.mxu0 %v443
        %470 = vmatprep.subr.bf16.mxu0 %v442
        %471 = vmatpush1.bf16.msra.mxu0 %v441
        %472 = vmatprep.subr.bf16.mxu0 %v440
        %473 = vmatpush1.bf16.msra.mxu0 %v439
        %474 = vmatprep.subr.bf16.mxu0 0
        %475 = vmatpush2.bf16.msra.mxu0 0
        %476 = vmatprep.subr.bf16.mxu0 0
        %477 = vmatpush2.bf16.msra.mxu0 0
        %478 = vmatprep.subr.bf16.mxu0 0
        %479 = vmatpush2.bf16.msra.mxu0 0
        %480 = vmatprep.subr.bf16.mxu0 0
        %481 = vmatpush2.bf16.msra.mxu0 0
        %482 = vmatprep.subr.bf16.mxu0 0
        %483 = vmatpush2.bf16.msra.mxu0 0
        %484 = vmatprep.subr.bf16.mxu0 0
        %485 = vmatpush2.bf16.msra.mxu0 0
        %486 = vmatprep.subr.bf16.mxu0 0
        %487 = vmatpush2.bf16.msra.mxu0 0
        %488 = vmatprep.subr.bf16.mxu0 0
        %489 = vmatpush2.bf16.msra.mxu0 0
        %490 = vmatprep.mubr.bf16.mxu0 0
        %491 = vmatmul.mubr.bf16.gmra.mxu0 %v456
        %v492 = vpop.f32.mrf.mxu0
        %v493 = vadd.f32 0.0, %v492
        %v494 = vpop.f32.mrf.mxu0
        %v495 = vadd.f32 0.0, %v494
        %v496 = vpop.f32.mrf.mxu0
        %v497 = vadd.f32 0.0, %v496
        %v498 = vpop.f32.mrf.mxu0
        %v499 = vadd.f32 0.0, %v498
        %500 = vdwg.mxu0
        %v501 = vadd.f32 %v390, %v493
        %v502 = vadd.f32 %v392, %v495
        %v503 = vadd.f32 %v394, %v497
        %v504 = vadd.f32 %v396, %v499
        %v505 = vld [vmem:[%s2] sm:$0x3]
        %v507 = vlaneseq
        %v508 = vshrl.u32 %v507, 7
        %v509 = vsub.s32 0, %v508
        %v510 = vrot.slane %v505, %v509
        %v511 = vlaneseq
        %v512 = vshrl.u32 %v511, 7
        %v513 = vsub.s32 1, %v512
        %v514 = vrot.slane %v505, %v513
        %v517 = vadd.f32 %v501, %v510
        %v518 = vadd.f32 %v502, %v514
        %v519 = vadd.f32 %v503, %v510
        %v520 = vadd.f32 %v504, %v514
        %v521 = vpack.c.bf16 %v519, %v517
        %v522 = vpack.c.bf16 %v520, %v518
        %v525 = vunpack.c.l.b16 %v521
        %v526 = vunpack.c.l.b16 %v522
        %v527 = vunpack.c.h.b16 %v521
        %v528 = vunpack.c.h.b16 %v522
        %v529 = vpack.c.b16 %v526, %v525
        %v530 = vpack.c.b16 %v528, %v527
        %533 = vst [vmem:[%s178] sm:$0xff] %v529
        %534 = vst [vmem:[%s178 + $0x8] sm:$0xff] %v530
        %s535 = sand.u32 %s94, 1
        %s536 = scalar_lea.sflag [#allocation4], %s535
        %s537 = sand.u32 %s94, 1
        %s538 = smul.addr %s537, 16
        %s539 = scalar_lea.vmem [#allocation5], %s538
        // Predicated region
        $region37: #{tpu_custom_call.1} parent=31 // pred_check
          %p540 = pneg %p104
        $region38: #{tpu_custom_call.1} parent=31 // pred_check_branch
          %542 = sbr.rel (%p540) target = $region40
        $region39: #{tpu_custom_call.1} parent=31 // pred_region
          %s544 = ssub.s32 256, 256
          %545 = vsyncadd %s536, %s544
          %s546 = smul.addr %s18, 4
          %s547 = smul.addr %s546, 64
          %s548 = scalar_lea.hbm %s3, %s547
          %s549 = sshll.u32 %s539, 4
          %s550 = int_to_ptr.vmem [resolvable:$true] %s549
          %555 = dma.vmem_to_hbm [thread:$0]  %s550, 256, %s548, %s536, 128, 128, 8
        $region40: #{tpu_custom_call.1} parent=31 // pred_fallthru
          _
      $region32: #{tpu_custom_call.1} parent=5 // pred_fallthru
        _
      %p556 = scmp.le.s32.totalorder 2, %s13
      // Predicated region
      $region41: #{tpu_custom_call.1} parent=5 // pred_check
        %p557 = pneg %p556
      $region42: #{tpu_custom_call.1} parent=5 // pred_check_branch
        %559 = sbr.rel (%p557) target = $region44
      $region43: #{tpu_custom_call.1} parent=5 // pred_region
        %s560 = ssub.s32 %s13, 2
        // Predicated region
        $region45: #{tpu_custom_call.1} parent=43 // pred_check
          %p561 = pneg %p110
        $region46: #{tpu_custom_call.1} parent=43 // pred_check_branch
          %563 = sbr.rel (%p561) target = $region48
        $region47: #{tpu_custom_call.1} parent=43 // pred_region
          %s564 = sand.u32 %s95, 1
          %s565 = scalar_lea.sflag [#allocation4], %s564
          %s566 = sand.u32 %s95, 1
          %s567 = smul.addr %s566, 16
          %s568 = scalar_lea.vmem [#allocation5], %s567
          %569 = dma.done %s565, 256
        $region48: #{tpu_custom_call.1} parent=43 // pred_fallthru
          _
      $region44: #{tpu_custom_call.1} parent=5 // pred_fallthru
        _
    $region6: #{tpu_custom_call.1} parent=1 // loop_footer
      %s17 = sadd.s32 1, %s13
    $region7: #{tpu_custom_call.1} parent=1 // loop_footer_branch
      %12 = sbr.rel target = $region3
    $region8: #{tpu_custom_call.1} parent=1 // loop_exit
      _
    %570 = vsyncpa [#allocation3], 1
    %s571 = scalar_lea.sflag [#allocation3], 1
    %572 = vsyncpa %s571, 1
    %573 = vsyncpa [#allocation4], 1
    %s574 = scalar_lea.sflag [#allocation4], 1
    %575 = vsyncpa %s574, 1

</llo_original>
